<compile_context>
chip_gen: v5e
topology: v5e:2x2
jax: 0.10.0
libtpu: 0.0.40
codegen_flags: <defaults>
</compile_context>

<pallas_src>
import functools

import jax
import jax.numpy as jnp
from jax.experimental import pallas as pl
from jax.experimental.pallas import tpu as pltpu


def _round_up(n: int, m: int) -> int:
    return ((n + m - 1) // m) * m


def mlp_kernel(x_ref, w1_ref, b1_ref, w2_ref, b2_ref, w3_ref, b3_ref, o_ref):
    # linear1 + relu
    h1 = jnp.dot(x_ref[...], w1_ref[...], preferred_element_type=jnp.float32)
    h1 = jnp.maximum(h1 + b1_ref[...], 0.0)
    # linear2 + relu
    h2 = jnp.dot(h1, w2_ref[...], preferred_element_type=jnp.float32)
    h2 = jnp.maximum(h2 + b2_ref[...], 0.0)
    # linear3 (no activation -- forward() does not apply self.last_op)
    out = jnp.dot(h2, w3_ref[...], preferred_element_type=jnp.float32)
    o_ref[...] = (out + b3_ref[...]).astype(o_ref.dtype)


@functools.partial(jax.jit, static_argnames=("tm",))
def mlp_forward(x, params, *, tm=None):
    """x: (batch, in_ch) f32.  params: pre-transposed (in, out) weights + (1, out) biases."""
    w1, b1, w2, b2, w3, b3 = params
    batch, in_ch = x.shape
    h1_dim = w1.shape[1]   # 64
    h2_dim = w2.shape[1]   # 256
    out_ch = w3.shape[1]

    # Batch tile selection (all Python / static):
    #   * small batch  -> one tile, rounded only to the 8-row sublane granule.
    #   * larger batch -> >=2 grid steps (v7x megacore split), tile cap 1024 rows.
    if tm is None:
        if batch <= 256:
            tm = _round_up(batch, 8)
        else:
            tm = min(1024, _round_up(pl.cdiv(batch, 2), 128))
    tm = max(8, min(tm, _round_up(batch, 8)))
    grid = (pl.cdiv(batch, tm),)

    out = pl.pallas_call(
        mlp_kernel,
        out_shape=jax.ShapeDtypeStruct((batch, out_ch), jnp.float32),
        grid_spec=pltpu.PrefetchScalarGridSpec(
            num_scalar_prefetch=0,
            grid=grid,
            in_specs=[
                pl.BlockSpec((tm, in_ch), lambda i: (i, 0)),        # x streams per tile
                pl.BlockSpec((in_ch, h1_dim), lambda i: (0, 0)),    # weights stay resident
                pl.BlockSpec((1, h1_dim), lambda i: (0, 0)),
                pl.BlockSpec((h1_dim, h2_dim), lambda i: (0, 0)),
                pl.BlockSpec((1, h2_dim), lambda i: (0, 0)),
                pl.BlockSpec((h2_dim, out_ch), lambda i: (0, 0)),
                pl.BlockSpec((1, out_ch), lambda i: (0, 0)),
            ],
            out_specs=pl.BlockSpec((tm, out_ch), lambda i: (i, 0)),
        ),
        compiler_params=pltpu.CompilerParams(
            dimension_semantics=("parallel",),
        ),
    )(x, w1, b1, w2, b2, w3, b3)

    return out


def init_params(key, input_channel, output_channel):
    """Deterministic synthetic init (PyTorch-Linear-like uniform fan-in scaling)."""
    ks = jax.random.split(key, 6)

    def linear(kw, kb, fan_in, fan_out):
        bound = 1.0 / jnp.sqrt(fan_in)
        # stored already transposed: (in, out)
        w = jax.random.uniform(kw, (fan_in, fan_out), jnp.float32, -bound, bound)
        b = jax.random.uniform(kb, (1, fan_out), jnp.float32, -bound, bound)
        return w, b

    w1, b1 = linear(ks[0], ks[1], input_channel, 64)
    w2, b2 = linear(ks[2], ks[3], 64, 256)
    w3, b3 = linear(ks[4], ks[5], 256, output_channel)
    return (w1, b1, w2, b2, w3, b3)


def reference_forward(x, params):
    w1, b1, w2, b2, w3, b3 = params
    h = jnp.maximum(x @ w1 + b1, 0.0)
    h = jnp.maximum(h @ w2 + b2, 0.0)
    return h @ w3 + b3


if __name__ == "__main__":
    key = jax.random.PRNGKey(0)
    k_x, k_p = jax.random.split(key)

    batch = 8
    input_channel = 16
    output_channel = 12

    x = jax.random.normal(k_x, (batch, input_channel), jnp.float32)
    params = init_params(k_p, input_channel, output_channel)

    out = mlp_forward(x, params)
    out = jax.block_until_ready(out)

    ref = reference_forward(x, params)
    assert out.shape == (batch, output_channel)
    assert jnp.allclose(out, ref, atol=1e-5, rtol=1e-5), "mismatch vs JAX reference"

    print("KERNEL_OK")
</pallas_src>

<mosaic_0001>
module attributes {stable_mosaic.version = 11 : i64} {
  func.func @mlp_kernel(%arg0: i32, %arg1: memref<8x16xf32, #tpu.memory_space<vmem>>, %arg2: memref<16x64xf32, #tpu.memory_space<vmem>>, %arg3: memref<1x64xf32, #tpu.memory_space<vmem>>, %arg4: memref<64x256xf32, #tpu.memory_space<vmem>>, %arg5: memref<1x256xf32, #tpu.memory_space<vmem>>, %arg6: memref<256x12xf32, #tpu.memory_space<vmem>>, %arg7: memref<1x12xf32, #tpu.memory_space<vmem>>, %arg8: memref<8x12xf32, #tpu.memory_space<vmem>>) attributes {dimension_semantics = [#tpu.dimension_semantics<parallel>], iteration_bounds = array<i64: 1>, scalar_prefetch = 0 : i64, scratch_operands = 0 : i64, tpu.core_type = #tpu.core_type<tc>, window_params = [{transform_indices = @transform_0, window_bounds = array<i64: 8, 16>}, {pipeline_mode = #tpu.pipeline_mode<synchronous>, transform_indices = @transform_1, window_bounds = array<i64: 16, 64>}, {pipeline_mode = #tpu.pipeline_mode<synchronous>, transform_indices = @transform_2, window_bounds = array<i64: 1, 64>}, {pipeline_mode = #tpu.pipeline_mode<synchronous>, transform_indices = @transform_3, window_bounds = array<i64: 64, 256>}, {pipeline_mode = #tpu.pipeline_mode<synchronous>, transform_indices = @transform_4, window_bounds = array<i64: 1, 256>}, {pipeline_mode = #tpu.pipeline_mode<synchronous>, transform_indices = @transform_5, window_bounds = array<i64: 256, 12>}, {pipeline_mode = #tpu.pipeline_mode<synchronous>, transform_indices = @transform_6, window_bounds = array<i64: 1, 12>}, {transform_indices = @transform_7, window_bounds = array<i64: 8, 12>}]} {
    %c0 = arith.constant 0 : index
    %c0_0 = arith.constant 0 : index
    %0 = vector.load %arg1[%c0, %c0_0] : memref<8x16xf32, #tpu.memory_space<vmem>>, vector<8x16xf32>
    %c0_1 = arith.constant 0 : index
    %c0_2 = arith.constant 0 : index
    %1 = vector.load %arg2[%c0_1, %c0_2] : memref<16x64xf32, #tpu.memory_space<vmem>>, vector<16x64xf32>
    %cst = arith.constant dense<0.000000e+00> : vector<8x64xf32>
    %2 = tpu.matmul %0, %1, %cst {dimension_numbers = #tpu.dot_dimension_numbers<[1], [0], [0], [1], [0, 0, 1, 1], [], []>} : vector<8x16xf32>, vector<16x64xf32>, vector<8x64xf32> -> vector<8x64xf32>
    %c0_3 = arith.constant 0 : index
    %c0_4 = arith.constant 0 : index
    %3 = vector.load %arg3[%c0_3, %c0_4] : memref<1x64xf32, #tpu.memory_space<vmem>>, vector<1x64xf32>
    %4 = vector.broadcast %3 : vector<1x64xf32> to vector<8x64xf32>
    %5 = arith.addf %2, %4 : vector<8x64xf32>
    %cst_5 = arith.constant 0.000000e+00 : f32
    %6 = vector.broadcast %cst_5 : f32 to vector<8x64xf32>
    %7 = arith.maximumf %5, %6 : vector<8x64xf32>
    %c0_6 = arith.constant 0 : index
    %c0_7 = arith.constant 0 : index
    %8 = vector.load %arg4[%c0_6, %c0_7] : memref<64x256xf32, #tpu.memory_space<vmem>>, vector<64x256xf32>
    %cst_8 = arith.constant dense<0.000000e+00> : vector<8x256xf32>
    %9 = tpu.matmul %7, %8, %cst_8 {dimension_numbers = #tpu.dot_dimension_numbers<[1], [0], [0], [1], [0, 0, 1, 1], [], []>} : vector<8x64xf32>, vector<64x256xf32>, vector<8x256xf32> -> vector<8x256xf32>
    %c0_9 = arith.constant 0 : index
    %c0_10 = arith.constant 0 : index
    %10 = vector.load %arg5[%c0_9, %c0_10] : memref<1x256xf32, #tpu.memory_space<vmem>>, vector<1x256xf32>
    %11 = vector.broadcast %10 : vector<1x256xf32> to vector<8x256xf32>
    %12 = arith.addf %9, %11 : vector<8x256xf32>
    %cst_11 = arith.constant 0.000000e+00 : f32
    %13 = vector.broadcast %cst_11 : f32 to vector<8x256xf32>
    %14 = arith.maximumf %12, %13 : vector<8x256xf32>
    %c0_12 = arith.constant 0 : index
    %c0_13 = arith.constant 0 : index
    %15 = vector.load %arg6[%c0_12, %c0_13] : memref<256x12xf32, #tpu.memory_space<vmem>>, vector<256x12xf32>
    %cst_14 = arith.constant dense<0.000000e+00> : vector<8x12xf32>
    %16 = tpu.matmul %14, %15, %cst_14 {dimension_numbers = #tpu.dot_dimension_numbers<[1], [0], [0], [1], [0, 0, 1, 1], [], []>} : vector<8x256xf32>, vector<256x12xf32>, vector<8x12xf32> -> vector<8x12xf32>
    %c0_15 = arith.constant 0 : index
    %c0_16 = arith.constant 0 : index
    %17 = vector.load %arg7[%c0_15, %c0_16] : memref<1x12xf32, #tpu.memory_space<vmem>>, vector<1x12xf32>
    %18 = vector.broadcast %17 : vector<1x12xf32> to vector<8x12xf32>
    %19 = arith.addf %16, %18 : vector<8x12xf32>
    %c0_17 = arith.constant 0 : index
    %c0_18 = arith.constant 0 : index
    %20 = vector.load %arg8[%c0_17, %c0_18] : memref<8x12xf32, #tpu.memory_space<vmem>>, vector<8x12xf32>
    tpu.vector_store %arg8[%c0_17, %c0_18], %19 {strides = array<i32>} : memref<8x12xf32, #tpu.memory_space<vmem>>, vector<8x12xf32>,
    return
  }
  func.func @transform_0(%arg0: i32) -> (i32, i32) {
    %c0_i32 = arith.constant 0 : i32
    %c0_i32_0 = arith.constant 0 : i32
    return %arg0, %c0_i32 : i32, i32
  }
  func.func @transform_1(%arg0: i32) -> (i32, i32) {
    %c0_i32 = arith.constant 0 : i32
    %c0_i32_0 = arith.constant 0 : i32
    %c0_i32_1 = arith.constant 0 : i32
    return %c0_i32, %c0_i32_0 : i32, i32
  }
  func.func @transform_2(%arg0: i32) -> (i32, i32) {
    %c0_i32 = arith.constant 0 : i32
    %c0_i32_0 = arith.constant 0 : i32
    %c0_i32_1 = arith.constant 0 : i32
    return %c0_i32, %c0_i32_0 : i32, i32
  }
  func.func @transform_3(%arg0: i32) -> (i32, i32) {
    %c0_i32 = arith.constant 0 : i32
    %c0_i32_0 = arith.constant 0 : i32
    %c0_i32_1 = arith.constant 0 : i32
    return %c0_i32, %c0_i32_0 : i32, i32
  }
  func.func @transform_4(%arg0: i32) -> (i32, i32) {
    %c0_i32 = arith.constant 0 : i32
    %c0_i32_0 = arith.constant 0 : i32
    %c0_i32_1 = arith.constant 0 : i32
    return %c0_i32, %c0_i32_0 : i32, i32
  }
  func.func @transform_5(%arg0: i32) -> (i32, i32) {
    %c0_i32 = arith.constant 0 : i32
    %c0_i32_0 = arith.constant 0 : i32
    %c0_i32_1 = arith.constant 0 : i32
    return %c0_i32, %c0_i32_0 : i32, i32
  }
  func.func @transform_6(%arg0: i32) -> (i32, i32) {
    %c0_i32 = arith.constant 0 : i32
    %c0_i32_0 = arith.constant 0 : i32
    %c0_i32_1 = arith.constant 0 : i32
    return %c0_i32, %c0_i32_0 : i32, i32
  }
  func.func @transform_7(%arg0: i32) -> (i32, i32) {
    %c0_i32 = arith.constant 0 : i32
    %c0_i32_0 = arith.constant 0 : i32
    return %arg0, %c0_i32 : i32, i32
  }
}

</mosaic_0001>

<llo_original>
// kernel: mlp_forward.1
$region0: #{mlp_forward.1}
  #allocation0 [shape = 'u32[]', space=smem, size = 0x4, offset = 0x4, fixed_abs, tag = 'smem constant byte address 0x4 - core index']
  #allocation1 [shape = 'u32[72,128]{1,0:T(1,128)}', space=vmem, size = 0x9000, scoped, tag = 'internal scratch']
  %s0 = inlined_call_operand.vmem [shape: f32[8,16], index: 0, kind: input, shape index: {}]
  %s1 = inlined_call_operand.vmem [shape: f32[16,64], index: 1, kind: input, shape index: {}]
  %s2 = inlined_call_operand.vmem [shape: f32[1,64], index: 2, kind: input, shape index: {}]
  %s3 = inlined_call_operand.vmem [shape: f32[64,256], index: 3, kind: input, shape index: {}]
  %s4 = inlined_call_operand.vmem [shape: f32[1,256], index: 4, kind: input, shape index: {}]
  %s5 = inlined_call_operand.vmem [shape: f32[256,12], index: 5, kind: input, shape index: {}]
  %s6 = inlined_call_operand.vmem [shape: f32[1,12], index: 6, kind: input, shape index: {}]
  %s7 = inlined_call_operand.hbm [shape: f32[8,12], index: 7, kind: output, shape index: {}]
  %s8 = sld [smem:[#allocation0]]
  $region38: #{mlp_forward.1} parent=0
    _
  %s10 = ssub.s32 1, %s8
  %s11 = scalar_select 0, %s10, %s8
  $region1: #{mlp_forward.1} parent=0
    #allocation2 [shape = 'u8[4096]{0}', space=vmem, size = 0x1000, scoped, tag = 'output window, operand 0, single buffered']
    #allocation3 [shape = 's32[1]{0}', space=sflag, size = 0x4, scoped, tag = 'scoped memory for mlp_forward.1']
    %12 = vsyncpa [#allocation3], 0
    // Predicated region
    $region2: #{mlp_forward.1} parent=1 // pred_check
      _
    $region3: #{mlp_forward.1} parent=1 // pred_check_branch
      %14 = sbr.rel (0) target = $region5
    $region4: #{mlp_forward.1} parent=1 // pred_region
      _
    $region5: #{mlp_forward.1} parent=1 // pred_fallthru
      _
    // Predicated region
    $region6: #{mlp_forward.1} parent=1 // pred_check
      _
    $region7: #{mlp_forward.1} parent=1 // pred_check_branch
      %16 = sbr.rel (0) target = $region9
    $region8: #{mlp_forward.1} parent=1 // pred_region
      _
    $region9: #{mlp_forward.1} parent=1 // pred_fallthru
      _
    // Predicated region
    $region10: #{mlp_forward.1} parent=1 // pred_check
      _
    $region11: #{mlp_forward.1} parent=1 // pred_check_branch
      %18 = sbr.rel (0) target = $region13
    $region12: #{mlp_forward.1} parent=1 // pred_region
      _
    $region13: #{mlp_forward.1} parent=1 // pred_fallthru
      _
    // Predicated region
    $region14: #{mlp_forward.1} parent=1 // pred_check
      _
    $region15: #{mlp_forward.1} parent=1 // pred_check_branch
      %20 = sbr.rel (0) target = $region17
    $region16: #{mlp_forward.1} parent=1 // pred_region
      _
    $region17: #{mlp_forward.1} parent=1 // pred_fallthru
      _
    // Predicated region
    $region18: #{mlp_forward.1} parent=1 // pred_check
      _
    $region19: #{mlp_forward.1} parent=1 // pred_check_branch
      %22 = sbr.rel (0) target = $region21
    $region20: #{mlp_forward.1} parent=1 // pred_region
      _
    $region21: #{mlp_forward.1} parent=1 // pred_fallthru
      _
    // Predicated region
    $region22: #{mlp_forward.1} parent=1 // pred_check
      _
    $region23: #{mlp_forward.1} parent=1 // pred_check_branch
      %24 = sbr.rel (0) target = $region25
    $region24: #{mlp_forward.1} parent=1 // pred_region
      _
    $region25: #{mlp_forward.1} parent=1 // pred_fallthru
      _
    // Predicated region
    $region26: #{mlp_forward.1} parent=1 // pred_check
      _
    $region27: #{mlp_forward.1} parent=1 // pred_check_branch
      %26 = sbr.rel (0) target = $region29
    $region28: #{mlp_forward.1} parent=1 // pred_region
      _
    $region29: #{mlp_forward.1} parent=1 // pred_fallthru
      _
    %v27 = vld [vmem:[%s0] sm:$0xff]
    %v28 = vld [vmem:[%s1] sm:$0xff]
    %v29 = vld [vmem:[%s1 + $0x8] sm:$0xff]
    %v30 = vld [vmem:[%s2] sm:$0x1]
    %v32 = vperm.slane %v30, 0
    %vm34 = vcmask 130048
    %v36 = vsel %vm34, %v27, 0
    %38 = vmatpush.msra.mxu0 0.0
    %39 = vmatpush.msra.mxu0 0.0
    %40 = vmatpush.msra.mxu0 0.0
    %41 = vmatpush.msra.mxu0 0.0
    %42 = vmatpush.msra.mxu0 0.0
    %43 = vmatpush.msra.mxu0 0.0
    %44 = vmatpush.msra.mxu0 0.0
    %45 = vmatpush.msra.mxu0 0.0
    %46 = vmatpush.msra.mxu0 0.0
    %47 = vmatpush.msra.mxu0 0.0
    %48 = vmatpush.msra.mxu0 0.0
    %49 = vmatpush.msra.mxu0 0.0
    %50 = vmatpush.msra.mxu0 0.0
    %51 = vmatpush.msra.mxu0 0.0
    %52 = vmatpush.msra.mxu0 %v29
    %53 = vmatpush.msra.mxu0 %v28
    %54 = vmatmul.f32.gmra.mxu0 %v36
    %v55 = vpop.f32.mrf.mxu0
    %v56 = vadd.f32 %v32, %v55
    %57 = vdwg.mxu0
    %v58 = vmax.f32 %v56, 0.0
    %v59 = vld [vmem:[%s3] sm:$0xff]
    %v60 = vld [vmem:[%s3 + $0x8] sm:$0xff]
    %v61 = vld [vmem:[%s3 + $0x10] sm:$0xff]
    %v62 = vld [vmem:[%s3 + $0x18] sm:$0xff]
    %v63 = vld [vmem:[%s3 + $0x20] sm:$0xff]
    %v64 = vld [vmem:[%s3 + $0x28] sm:$0xff]
    %v65 = vld [vmem:[%s3 + $0x30] sm:$0xff]
    %v66 = vld [vmem:[%s3 + $0x38] sm:$0xff]
    %v67 = vld [vmem:[%s3 + $0x40] sm:$0xff]
    %v68 = vld [vmem:[%s3 + $0x48] sm:$0xff]
    %v69 = vld [vmem:[%s3 + $0x50] sm:$0xff]
    %v70 = vld [vmem:[%s3 + $0x58] sm:$0xff]
    %v71 = vld [vmem:[%s3 + $0x60] sm:$0xff]
    %v72 = vld [vmem:[%s3 + $0x68] sm:$0xff]
    %v73 = vld [vmem:[%s3 + $0x70] sm:$0xff]
    %v74 = vld [vmem:[%s3 + $0x78] sm:$0xff]
    %v75 = vld [vmem:[%s4] sm:$0x3]
    %v77 = vperm.slane %v75, 0
    %v78 = vperm.slane %v75, 1
    %vm81 = vcmask 523264
    %v83 = vsel %vm81, %v58, 0
    %85 = vmatpush.msra.mxu0 0.0
    %86 = vmatpush.msra.mxu0 0.0
    %87 = vmatpush.msra.mxu0 0.0
    %88 = vmatpush.msra.mxu0 0.0
    %89 = vmatpush.msra.mxu0 0.0
    %90 = vmatpush.msra.mxu0 0.0
    %91 = vmatpush.msra.mxu0 0.0
    %92 = vmatpush.msra.mxu0 0.0
    %93 = vmatpush.msra.mxu0 %v73
    %94 = vmatpush.msra.mxu0 %v71
    %95 = vmatpush.msra.mxu0 %v69
    %96 = vmatpush.msra.mxu0 %v67
    %97 = vmatpush.msra.mxu0 %v65
    %98 = vmatpush.msra.mxu0 %v63
    %99 = vmatpush.msra.mxu0 %v61
    %100 = vmatpush.msra.mxu0 %v59
    %101 = vmatmul.f32.gmra.mxu0 %v83
    %v102 = vpop.f32.mrf.mxu0
    %v103 = vadd.f32 %v77, %v102
    %104 = vdwg.mxu0
    %105 = vmatpush.msra.mxu0 0.0
    %106 = vmatpush.msra.mxu0 0.0
    %107 = vmatpush.msra.mxu0 0.0
    %108 = vmatpush.msra.mxu0 0.0
    %109 = vmatpush.msra.mxu0 0.0
    %110 = vmatpush.msra.mxu0 0.0
    %111 = vmatpush.msra.mxu0 0.0
    %112 = vmatpush.msra.mxu0 0.0
    %113 = vmatpush.msra.mxu0 %v74
    %114 = vmatpush.msra.mxu0 %v72
    %115 = vmatpush.msra.mxu0 %v70
    %116 = vmatpush.msra.mxu0 %v68
    %117 = vmatpush.msra.mxu0 %v66
    %118 = vmatpush.msra.mxu0 %v64
    %119 = vmatpush.msra.mxu0 %v62
    %120 = vmatpush.msra.mxu0 %v60
    %121 = vmatmul.f32.gmra.mxu0 %v83
    %v122 = vpop.f32.mrf.mxu0
    %v123 = vadd.f32 %v78, %v122
    %124 = vdwg.mxu0
    %v125 = vmax.f32 %v103, 0.0
    %v126 = vmax.f32 %v123, 0.0
    %v127 = vld [vmem:[%s5] sm:$0xff]
    %v128 = vld [vmem:[%s5 + $0x8] sm:$0xff]
    %v129 = vld [vmem:[%s5 + $0x10] sm:$0xff]
    %v130 = vld [vmem:[%s5 + $0x18] sm:$0xff]
    %v131 = vld [vmem:[%s5 + $0x20] sm:$0xff]
    %v132 = vld [vmem:[%s5 + $0x28] sm:$0xff]
    %v133 = vld [vmem:[%s5 + $0x30] sm:$0xff]
    %v134 = vld [vmem:[%s5 + $0x38] sm:$0xff]
    %v135 = vld [vmem:[%s5 + $0x40] sm:$0xff]
    %v136 = vld [vmem:[%s5 + $0x48] sm:$0xff]
    %v137 = vld [vmem:[%s5 + $0x50] sm:$0xff]
    %v138 = vld [vmem:[%s5 + $0x58] sm:$0xff]
    %v139 = vld [vmem:[%s5 + $0x60] sm:$0xff]
    %v140 = vld [vmem:[%s5 + $0x68] sm:$0xff]
    %v141 = vld [vmem:[%s5 + $0x70] sm:$0xff]
    %v142 = vld [vmem:[%s5 + $0x78] sm:$0xff]
    %v143 = vld [vmem:[%s5 + $0x80] sm:$0xff]
    %v144 = vld [vmem:[%s5 + $0x88] sm:$0xff]
    %v145 = vld [vmem:[%s5 + $0x90] sm:$0xff]
    %v146 = vld [vmem:[%s5 + $0x98] sm:$0xff]
    %v147 = vld [vmem:[%s5 + $0xa0] sm:$0xff]
    %v148 = vld [vmem:[%s5 + $0xa8] sm:$0xff]
    %v149 = vld [vmem:[%s5 + $0xb0] sm:$0xff]
    %v150 = vld [vmem:[%s5 + $0xb8] sm:$0xff]
    %v151 = vld [vmem:[%s5 + $0xc0] sm:$0xff]
    %v152 = vld [vmem:[%s5 + $0xc8] sm:$0xff]
    %v153 = vld [vmem:[%s5 + $0xd0] sm:$0xff]
    %v154 = vld [vmem:[%s5 + $0xd8] sm:$0xff]
    %v155 = vld [vmem:[%s5 + $0xe0] sm:$0xff]
    %v156 = vld [vmem:[%s5 + $0xe8] sm:$0xff]
    %v157 = vld [vmem:[%s5 + $0xf0] sm:$0xff]
    %v158 = vld [vmem:[%s5 + $0xf8] sm:$0xff]
    %v159 = vld [vmem:[%s6] sm:$0x1]
    %v161 = vperm.slane %v159, 0
    %163 = vmatpush.msra.mxu0 %v142
    %164 = vmatpush.msra.mxu0 %v141
    %165 = vmatpush.msra.mxu0 %v140
    %166 = vmatpush.msra.mxu0 %v139
    %167 = vmatpush.msra.mxu0 %v138
    %168 = vmatpush.msra.mxu0 %v137
    %169 = vmatpush.msra.mxu0 %v136
    %170 = vmatpush.msra.mxu0 %v135
    %171 = vmatpush.msra.mxu0 %v134
    %172 = vmatpush.msra.mxu0 %v133
    %173 = vmatpush.msra.mxu0 %v132
    %174 = vmatpush.msra.mxu0 %v131
    %175 = vmatpush.msra.mxu0 %v130
    %176 = vmatpush.msra.mxu0 %v129
    %177 = vmatpush.msra.mxu0 %v128
    %178 = vmatpush.msra.mxu0 %v127
    %179 = vmatmul.f32.gmra.mxu0 %v125
    %v180 = vpop.f32.mrf.mxu0
    %v181 = vadd.f32 %v161, %v180
    %182 = vdwg.mxu0
    %183 = vmatpush.msra.mxu0 %v158
    %184 = vmatpush.msra.mxu0 %v157
    %185 = vmatpush.msra.mxu0 %v156
    %186 = vmatpush.msra.mxu0 %v155
    %187 = vmatpush.msra.mxu0 %v154
    %188 = vmatpush.msra.mxu0 %v153
    %189 = vmatpush.msra.mxu0 %v152
    %190 = vmatpush.msra.mxu0 %v151
    %191 = vmatpush.msra.mxu0 %v150
    %192 = vmatpush.msra.mxu0 %v149
    %193 = vmatpush.msra.mxu0 %v148
    %194 = vmatpush.msra.mxu0 %v147
    %195 = vmatpush.msra.mxu0 %v146
    %196 = vmatpush.msra.mxu0 %v145
    %197 = vmatpush.msra.mxu0 %v144
    %198 = vmatpush.msra.mxu0 %v143
    %199 = vmatmul.f32.gmra.mxu0 %v126
    %v200 = vpop.f32.mrf.mxu0
    %v201 = vadd.f32 %v181, %v200
    %202 = vdwg.mxu0
    %vm203 = vcmask 97280
    %204 = vst.msk [vmem:[#allocation2] sm:$0xff] %vm203, %v201
    // Predicated region
    $region30: #{mlp_forward.1} parent=1 // pred_check
      _
    $region31: #{mlp_forward.1} parent=1 // pred_check_branch
      %206 = sbr.rel (0) target = $region33
    $region32: #{mlp_forward.1} parent=1 // pred_region
      %208 = vsyncadd [#allocation3], 0
      %s210 = sshll.u32 [#allocation2], 4
      %s211 = int_to_ptr.vmem [resolvable:$true] %s210
      %s212 = sshll.u32 %s7, 4
      %s213 = int_to_ptr.hbm [resolvable:$true] %s212
      %215 = dma.vmem_to_hbm [thread:$0]  %s211, 128, %s213, [#allocation3]
    $region33: #{mlp_forward.1} parent=1 // pred_fallthru
      _
    // Predicated region
    $region34: #{mlp_forward.1} parent=1 // pred_check
      _
    $region35: #{mlp_forward.1} parent=1 // pred_check_branch
      %217 = sbr.rel (0) target = $region37
    $region36: #{mlp_forward.1} parent=1 // pred_region
      %219 = dma.done [#allocation3], 128
    $region37: #{mlp_forward.1} parent=1 // pred_fallthru
      _
    %220 = vsyncpa [#allocation3], 1

</llo_original>
